<compile_context>
chip_gen: v7x
topology: tpu7x:2x2x1
jax: 0.10.0
libtpu: 0.0.40
codegen_flags: <defaults>
</compile_context>

<pallas_src>
import functools

import jax
import jax.numpy as jnp
from jax.experimental import pallas as pl
from jax.experimental.pallas import tpu as pltpu


def _round_up(x, m):
    return ((x + m - 1) // m) * m


def textcnn_kernel(*refs, filter_sizes, num_filters, seq_len, col_offsets):
    """One batch tile: fused conv1d (stacked-tap matmul) + ReLU + max-pool over
    time + linear head. Dropout is eval-mode identity."""
    n_conv = len(filter_sizes)
    emb_ref = refs[0]                               # (tile_b*L, E)   bf16
    w_ref = refs[1]                                 # (E, Npad)       bf16
    b_refs = refs[2:2 + n_conv]                     # (1, F)          f32
    fw_refs = refs[2 + n_conv:2 + 2 * n_conv]       # (F, C)          f32
    fcb_ref = refs[2 + 2 * n_conv]                  # (1, C)          f32
    out_ref = refs[3 + 2 * n_conv]                  # (tile_b, C)     f32

    L = seq_len
    F = num_filters
    tile_b = out_ref.shape[0]
    n_classes = out_ref.shape[1]

    # Single lane-dense MXU matmul covering every tap of every filter size.
    y = jnp.dot(emb_ref[...], w_ref[...],
                preferred_element_type=jnp.float32)      # (tile_b*L, Npad) f32
    y = y.reshape(tile_b, L, y.shape[-1])

    # FC accumulated per filter bank -> no concat of pooled features needed.
    logits = jnp.zeros((tile_b, n_classes), jnp.float32) + fcb_ref[...]
    for ci, k in enumerate(filter_sizes):
        lout = L - k + 1
        off = col_offsets[ci]
        acc = y[:, 0:lout, off:off + F]
        for dk in range(1, k):                            # static unroll
            acc = acc + y[:, dk:dk + lout, off + dk * F:off + (dk + 1) * F]
        acc = jnp.maximum(acc + b_refs[ci][...][:, None, :], 0.0)   # bias+ReLU
        pooled = jnp.max(acc, axis=1)                     # max_pool1d -> (tb,F)
        logits = logits + jnp.dot(pooled, fw_refs[ci][...],
                                  preferred_element_type=jnp.float32)
    out_ref[...] = logits.astype(out_ref.dtype)


def textcnn_forward(tokens, emb_table, conv_ws, conv_bs, fc_w, fc_b,
                    filter_sizes):
    """tokens: (B, L) int32; emb_table: (V, E);
    conv_ws[i]: (F, E, k_i) PyTorch Conv1d layout; conv_bs[i]: (F,);
    fc_w: (C, F*len(filter_sizes)); fc_b: (C,)."""
    B, L = tokens.shape
    _, E = emb_table.shape
    F = conv_bs[0].shape[0]
    C = fc_b.shape[0]
    n_conv = len(filter_sizes)
    assert L >= max(filter_sizes), "sequence shorter than largest conv kernel"

    # ---- parameter prep (glue) --------------------------------------------
    # Stack every (E, F) tap slice of every conv into one (E, Npad) bf16 matrix.
    cols, col_offsets, off = [], [], 0
    for w, k in zip(conv_ws, filter_sizes):
        w_t = jnp.transpose(w, (2, 1, 0))                # (k, E, F)
        for dk in range(k):
            cols.append(w_t[dk])                         # (E, F)
        col_offsets.append(off)
        off += k * F
    w_all = jnp.concatenate(cols, axis=1)                # (E, total_cols)
    total_cols = off
    npad = max(128, _round_up(total_cols, 128))
    if npad != total_cols:
        w_all = jnp.pad(w_all, ((0, 0), (0, npad - total_cols)))
    w_all = w_all.astype(jnp.bfloat16)

    b_args = [b.reshape(1, F).astype(jnp.float32) for b in conv_bs]
    fw_args = [fc_w[:, ci * F:(ci + 1) * F].T.astype(jnp.float32)
               for ci in range(n_conv)]                  # each (F, C)
    fcb_2d = fc_b.reshape(1, C).astype(jnp.float32)

    # ---- embedding gather (plain-JAX glue), bf16 halves the HBM stream ----
    # TODO(synk): fuse the gather into the kernel (scalar-prefetch tokens +
    # DMA gather) to avoid materializing (B, L, E) in HBM at all.
    emb = emb_table.astype(jnp.bfloat16)[tokens]         # (B, L, E) bf16

    # ---- batch tiling -------------------------------------------------------
    if B <= 8:
        tile_b = B
    else:
        tile_b = min(128, _round_up(B, 8))               # multiple of 8
    Bp = _round_up(B, tile_b)
    if Bp != B:
        emb = jnp.pad(emb, ((0, Bp - B), (0, 0), (0, 0)))
    emb_flat = emb.reshape(Bp * L, E)                    # flattened for the MXU
    grid = (Bp // tile_b,)

    # VMEM budget from the actual tile footprint (headroom for f32 temporaries;
    # capped at 64 MiB so it also fits v7x).
    emb_tile_bytes = tile_b * L * E * 2
    y_bytes = tile_b * L * npad * 4
    w_bytes = E * npad * 2
    est = 2 * emb_tile_bytes + w_bytes + 4 * y_bytes + (2 << 20)
    vmem_limit = int(min(max(est, 8 << 20), 64 << 20))

    flops = 2 * Bp * L * E * npad + n_conv * 2 * Bp * F * C
    bytes_accessed = (emb_flat.size * 2 + w_all.size * 2 + Bp * C * 4
                      + sum(a.size * 4 for a in b_args + fw_args) + C * 4)

    kernel = functools.partial(
        textcnn_kernel, filter_sizes=tuple(filter_sizes), num_filters=F,
        seq_len=L, col_offsets=tuple(col_offsets))

    in_specs = [pl.BlockSpec((tile_b * L, E), lambda i: (i, 0)),   # emb tile
                pl.BlockSpec(w_all.shape, lambda i: (0, 0))]       # resident
    for a in b_args + fw_args + [fcb_2d]:
        in_specs.append(pl.BlockSpec(a.shape, lambda i: (0, 0)))   # resident

    out = pl.pallas_call(
        kernel,
        out_shape=jax.ShapeDtypeStruct((Bp, C), jnp.float32),
        grid_spec=pltpu.PrefetchScalarGridSpec(
            num_scalar_prefetch=0,
            grid=grid,
            in_specs=in_specs,
            out_specs=pl.BlockSpec((tile_b, C), lambda i: (i, 0)),
        ),
        compiler_params=pltpu.CompilerParams(
            dimension_semantics=("parallel",),
            vmem_limit_bytes=vmem_limit),
        cost_estimate=pl.CostEstimate(
            flops=flops, transcendentals=0, bytes_accessed=bytes_accessed),
    )(emb_flat, w_all, *b_args, *fw_args, fcb_2d)
    return out[:B]


if __name__ == "__main__":
    # Small config consistent with the module's __init__.
    vocab_size = 50
    embed = 32                 # config.embed
    num_filters = 8            # config.num_filters
    filter_sizes = (2, 3, 4)   # config.filter_sizes
    num_classes = 4            # config.num_classes
    batch = 2
    seq_len = 16

    key = jax.random.PRNGKey(0)
    k_tok, k_emb, k_fcw, k_fcb, *k_convs = jax.random.split(
        key, 4 + 2 * len(filter_sizes))

    tokens = jax.random.randint(k_tok, (batch, seq_len), 0, vocab_size,
                                dtype=jnp.int32)
    emb_table = jax.random.normal(k_emb, (vocab_size, embed),
                                  dtype=jnp.float32) * 0.1

    conv_ws, conv_bs = [], []
    for i, k in enumerate(filter_sizes):
        conv_ws.append(jax.random.normal(
            k_convs[2 * i], (num_filters, embed, k), dtype=jnp.float32) * 0.1)
        conv_bs.append(jax.random.normal(
            k_convs[2 * i + 1], (num_filters,), dtype=jnp.float32) * 0.1)

    fc_w = jax.random.normal(
        k_fcw, (num_classes, num_filters * len(filter_sizes)),
        dtype=jnp.float32) * 0.1
    fc_b = jax.random.normal(k_fcb, (num_classes,), dtype=jnp.float32) * 0.1

    out = textcnn_forward(tokens, emb_table, conv_ws, conv_bs, fc_w, fc_b,
                          filter_sizes)
    out = jax.block_until_ready(out)
    assert out.shape == (batch, num_classes), out.shape

    # Plain-JAX reference using the same bf16-rounded MXU operands
    # (f32 accumulation / bias / ReLU / pool / FC) -> tight tolerance.
    emb_r = emb_table.astype(jnp.bfloat16).astype(jnp.float32)[tokens]
    feats = []
    for w, b, k in zip(conv_ws, conv_bs, filter_sizes):
        w_r = w.astype(jnp.bfloat16).astype(jnp.float32)
        lout = seq_len - k + 1
        acc = jnp.zeros((batch, lout, num_filters), jnp.float32)
        for dk in range(k):
            acc = acc + jnp.einsum('ble,fe->blf',
                                   emb_r[:, dk:dk + lout, :], w_r[:, :, dk])
        acc = jax.nn.relu(acc + b[None, None, :])
        feats.append(jnp.max(acc, axis=1))
    ref = jnp.concatenate(feats, axis=-1) @ fc_w.T + fc_b
    assert jnp.allclose(out, ref, atol=2e-3, rtol=2e-3), \
        float(jnp.max(jnp.abs(out - ref)))

    print("KERNEL_OK")
</pallas_src>

<mosaic_0001>
module attributes {stable_mosaic.version = 11 : i64} {
  func.func @textcnn_kernel(%arg0: i32, %arg1: memref<32x32xbf16, #tpu.memory_space<vmem>>, %arg2: memref<32x128xbf16, #tpu.memory_space<vmem>>, %arg3: memref<1x8xf32, #tpu.memory_space<vmem>>, %arg4: memref<1x8xf32, #tpu.memory_space<vmem>>, %arg5: memref<1x8xf32, #tpu.memory_space<vmem>>, %arg6: memref<8x4xf32, #tpu.memory_space<vmem>>, %arg7: memref<8x4xf32, #tpu.memory_space<vmem>>, %arg8: memref<8x4xf32, #tpu.memory_space<vmem>>, %arg9: memref<1x4xf32, #tpu.memory_space<vmem>>, %arg10: memref<2x4xf32, #tpu.memory_space<vmem>>) attributes {dimension_semantics = [#tpu.dimension_semantics<parallel>], iteration_bounds = array<i64: 1>, scalar_prefetch = 0 : i64, scratch_operands = 0 : i64, tpu.core_type = #tpu.core_type<tc>, window_params = [{transform_indices = @transform_0, window_bounds = array<i64: 32, 32>}, {pipeline_mode = #tpu.pipeline_mode<synchronous>, transform_indices = @transform_1, window_bounds = array<i64: 32, 128>}, {pipeline_mode = #tpu.pipeline_mode<synchronous>, transform_indices = @transform_2, window_bounds = array<i64: 1, 8>}, {pipeline_mode = #tpu.pipeline_mode<synchronous>, transform_indices = @transform_3, window_bounds = array<i64: 1, 8>}, {pipeline_mode = #tpu.pipeline_mode<synchronous>, transform_indices = @transform_4, window_bounds = array<i64: 1, 8>}, {pipeline_mode = #tpu.pipeline_mode<synchronous>, transform_indices = @transform_5, window_bounds = array<i64: 8, 4>}, {pipeline_mode = #tpu.pipeline_mode<synchronous>, transform_indices = @transform_6, window_bounds = array<i64: 8, 4>}, {pipeline_mode = #tpu.pipeline_mode<synchronous>, transform_indices = @transform_7, window_bounds = array<i64: 8, 4>}, {pipeline_mode = #tpu.pipeline_mode<synchronous>, transform_indices = @transform_8, window_bounds = array<i64: 1, 4>}, {transform_indices = @transform_9, window_bounds = array<i64: 2, 4>}]} {
    %c0 = arith.constant 0 : index
    %c0_0 = arith.constant 0 : index
    %0 = vector.load %arg1[%c0, %c0_0] : memref<32x32xbf16, #tpu.memory_space<vmem>>, vector<32x32xbf16>
    %c0_1 = arith.constant 0 : index
    %c0_2 = arith.constant 0 : index
    %1 = vector.load %arg2[%c0_1, %c0_2] : memref<32x128xbf16, #tpu.memory_space<vmem>>, vector<32x128xbf16>
    %cst = arith.constant dense<0.000000e+00> : vector<32x128xf32>
    %2 = tpu.matmul %0, %1, %cst {dimension_numbers = #tpu.dot_dimension_numbers<[1], [0], [0], [1], [0, 0, 1, 1], [], []>} : vector<32x32xbf16>, vector<32x128xbf16>, vector<32x128xf32> -> vector<32x128xf32>
    %3 = vector.shape_cast %2 : vector<32x128xf32> to vector<2x16x128xf32>
    %cst_3 = arith.constant 0.000000e+00 : f32
    %4 = vector.broadcast %cst_3 : f32 to vector<2x4xf32>
    %c0_4 = arith.constant 0 : index
    %c0_5 = arith.constant 0 : index
    %5 = vector.load %arg9[%c0_4, %c0_5] : memref<1x4xf32, #tpu.memory_space<vmem>>, vector<1x4xf32>
    %6 = vector.broadcast %5 : vector<1x4xf32> to vector<2x4xf32>
    %7 = arith.addf %4, %6 : vector<2x4xf32>
    %8 = vector.extract_strided_slice %3 {offsets = [0, 0, 0], sizes = [2, 15, 8], strides = [1, 1, 1]} : vector<2x16x128xf32> to vector<2x15x8xf32>
    %9 = vector.extract_strided_slice %3 {offsets = [0, 1, 8], sizes = [2, 15, 8], strides = [1, 1, 1]} : vector<2x16x128xf32> to vector<2x15x8xf32>
    %10 = arith.addf %8, %9 : vector<2x15x8xf32>
    %c0_6 = arith.constant 0 : index
    %c0_7 = arith.constant 0 : index
    %11 = vector.load %arg3[%c0_6, %c0_7] : memref<1x8xf32, #tpu.memory_space<vmem>>, vector<1x8xf32>
    %12 = vector.shape_cast %11 : vector<1x8xf32> to vector<1x1x8xf32>
    %13 = vector.broadcast %12 : vector<1x1x8xf32> to vector<2x15x8xf32>
    %14 = arith.addf %10, %13 : vector<2x15x8xf32>
    %cst_8 = arith.constant 0.000000e+00 : f32
    %15 = vector.broadcast %cst_8 : f32 to vector<2x15x8xf32>
    %16 = arith.maximumf %14, %15 : vector<2x15x8xf32>
    %cst_9 = arith.constant dense<0xFF800000> : vector<2x8xf32>
    %17 = vector.multi_reduction <maximumf>, %16, %cst_9 [1] : vector<2x15x8xf32> to vector<2x8xf32>
    %c0_10 = arith.constant 0 : index
    %c0_11 = arith.constant 0 : index
    %18 = vector.load %arg6[%c0_10, %c0_11] : memref<8x4xf32, #tpu.memory_space<vmem>>, vector<8x4xf32>
    %cst_12 = arith.constant dense<0.000000e+00> : vector<2x4xf32>
    %19 = tpu.matmul %17, %18, %cst_12 {dimension_numbers = #tpu.dot_dimension_numbers<[1], [0], [0], [1], [0, 0, 1, 1], [], []>} : vector<2x8xf32>, vector<8x4xf32>, vector<2x4xf32> -> vector<2x4xf32>
    %20 = arith.addf %7, %19 : vector<2x4xf32>
    %21 = vector.extract_strided_slice %3 {offsets = [0, 0, 16], sizes = [2, 14, 8], strides = [1, 1, 1]} : vector<2x16x128xf32> to vector<2x14x8xf32>
    %22 = vector.extract_strided_slice %3 {offsets = [0, 1, 24], sizes = [2, 14, 8], strides = [1, 1, 1]} : vector<2x16x128xf32> to vector<2x14x8xf32>
    %23 = arith.addf %21, %22 : vector<2x14x8xf32>
    %24 = vector.extract_strided_slice %3 {offsets = [0, 2, 32], sizes = [2, 14, 8], strides = [1, 1, 1]} : vector<2x16x128xf32> to vector<2x14x8xf32>
    %25 = arith.addf %23, %24 : vector<2x14x8xf32>
    %c0_13 = arith.constant 0 : index
    %c0_14 = arith.constant 0 : index
    %26 = vector.load %arg4[%c0_13, %c0_14] : memref<1x8xf32, #tpu.memory_space<vmem>>, vector<1x8xf32>
    %27 = vector.shape_cast %26 : vector<1x8xf32> to vector<1x1x8xf32>
    %28 = vector.broadcast %27 : vector<1x1x8xf32> to vector<2x14x8xf32>
    %29 = arith.addf %25, %28 : vector<2x14x8xf32>
    %cst_15 = arith.constant 0.000000e+00 : f32
    %30 = vector.broadcast %cst_15 : f32 to vector<2x14x8xf32>
    %31 = arith.maximumf %29, %30 : vector<2x14x8xf32>
    %cst_16 = arith.constant dense<0xFF800000> : vector<2x8xf32>
    %32 = vector.multi_reduction <maximumf>, %31, %cst_16 [1] : vector<2x14x8xf32> to vector<2x8xf32>
    %c0_17 = arith.constant 0 : index
    %c0_18 = arith.constant 0 : index
    %33 = vector.load %arg7[%c0_17, %c0_18] : memref<8x4xf32, #tpu.memory_space<vmem>>, vector<8x4xf32>
    %cst_19 = arith.constant dense<0.000000e+00> : vector<2x4xf32>
    %34 = tpu.matmul %32, %33, %cst_19 {dimension_numbers = #tpu.dot_dimension_numbers<[1], [0], [0], [1], [0, 0, 1, 1], [], []>} : vector<2x8xf32>, vector<8x4xf32>, vector<2x4xf32> -> vector<2x4xf32>
    %35 = arith.addf %20, %34 : vector<2x4xf32>
    %36 = vector.extract_strided_slice %3 {offsets = [0, 0, 40], sizes = [2, 13, 8], strides = [1, 1, 1]} : vector<2x16x128xf32> to vector<2x13x8xf32>
    %37 = vector.extract_strided_slice %3 {offsets = [0, 1, 48], sizes = [2, 13, 8], strides = [1, 1, 1]} : vector<2x16x128xf32> to vector<2x13x8xf32>
    %38 = arith.addf %36, %37 : vector<2x13x8xf32>
    %39 = vector.extract_strided_slice %3 {offsets = [0, 2, 56], sizes = [2, 13, 8], strides = [1, 1, 1]} : vector<2x16x128xf32> to vector<2x13x8xf32>
    %40 = arith.addf %38, %39 : vector<2x13x8xf32>
    %41 = vector.extract_strided_slice %3 {offsets = [0, 3, 64], sizes = [2, 13, 8], strides = [1, 1, 1]} : vector<2x16x128xf32> to vector<2x13x8xf32>
    %42 = arith.addf %40, %41 : vector<2x13x8xf32>
    %c0_20 = arith.constant 0 : index
    %c0_21 = arith.constant 0 : index
    %43 = vector.load %arg5[%c0_20, %c0_21] : memref<1x8xf32, #tpu.memory_space<vmem>>, vector<1x8xf32>
    %44 = vector.shape_cast %43 : vector<1x8xf32> to vector<1x1x8xf32>
    %45 = vector.broadcast %44 : vector<1x1x8xf32> to vector<2x13x8xf32>
    %46 = arith.addf %42, %45 : vector<2x13x8xf32>
    %cst_22 = arith.constant 0.000000e+00 : f32
    %47 = vector.broadcast %cst_22 : f32 to vector<2x13x8xf32>
    %48 = arith.maximumf %46, %47 : vector<2x13x8xf32>
    %cst_23 = arith.constant dense<0xFF800000> : vector<2x8xf32>
    %49 = vector.multi_reduction <maximumf>, %48, %cst_23 [1] : vector<2x13x8xf32> to vector<2x8xf32>
    %c0_24 = arith.constant 0 : index
    %c0_25 = arith.constant 0 : index
    %50 = vector.load %arg8[%c0_24, %c0_25] : memref<8x4xf32, #tpu.memory_space<vmem>>, vector<8x4xf32>
    %cst_26 = arith.constant dense<0.000000e+00> : vector<2x4xf32>
    %51 = tpu.matmul %49, %50, %cst_26 {dimension_numbers = #tpu.dot_dimension_numbers<[1], [0], [0], [1], [0, 0, 1, 1], [], []>} : vector<2x8xf32>, vector<8x4xf32>, vector<2x4xf32> -> vector<2x4xf32>
    %52 = arith.addf %35, %51 : vector<2x4xf32>
    %c0_27 = arith.constant 0 : index
    %c0_28 = arith.constant 0 : index
    %53 = vector.load %arg10[%c0_27, %c0_28] : memref<2x4xf32, #tpu.memory_space<vmem>>, vector<2x4xf32>
    tpu.vector_store %arg10[%c0_27, %c0_28], %52 {strides = array<i32>} : memref<2x4xf32, #tpu.memory_space<vmem>>, vector<2x4xf32>,
    return
  }
  func.func @transform_0(%arg0: i32) -> (i32, i32) {
    %c0_i32 = arith.constant 0 : i32
    %c0_i32_0 = arith.constant 0 : i32
    return %arg0, %c0_i32 : i32, i32
  }
  func.func @transform_1(%arg0: i32) -> (i32, i32) {
    %c0_i32 = arith.constant 0 : i32
    %c0_i32_0 = arith.constant 0 : i32
    %c0_i32_1 = arith.constant 0 : i32
    return %c0_i32, %c0_i32_0 : i32, i32
  }
  func.func @transform_2(%arg0: i32) -> (i32, i32) {
    %c0_i32 = arith.constant 0 : i32
    %c0_i32_0 = arith.constant 0 : i32
    %c0_i32_1 = arith.constant 0 : i32
    return %c0_i32, %c0_i32_0 : i32, i32
  }
  func.func @transform_3(%arg0: i32) -> (i32, i32) {
    %c0_i32 = arith.constant 0 : i32
    %c0_i32_0 = arith.constant 0 : i32
    %c0_i32_1 = arith.constant 0 : i32
    return %c0_i32, %c0_i32_0 : i32, i32
  }
  func.func @transform_4(%arg0: i32) -> (i32, i32) {
    %c0_i32 = arith.constant 0 : i32
    %c0_i32_0 = arith.constant 0 : i32
    %c0_i32_1 = arith.constant 0 : i32
    return %c0_i32, %c0_i32_0 : i32, i32
  }
  func.func @transform_5(%arg0: i32) -> (i32, i32) {
    %c0_i32 = arith.constant 0 : i32
    %c0_i32_0 = arith.constant 0 : i32
    %c0_i32_1 = arith.constant 0 : i32
    return %c0_i32, %c0_i32_0 : i32, i32
  }
  func.func @transform_6(%arg0: i32) -> (i32, i32) {
    %c0_i32 = arith.constant 0 : i32
    %c0_i32_0 = arith.constant 0 : i32
    %c0_i32_1 = arith.constant 0 : i32
    return %c0_i32, %c0_i32_0 : i32, i32
  }
  func.func @transform_7(%arg0: i32) -> (i32, i32) {
    %c0_i32 = arith.constant 0 : i32
    %c0_i32_0 = arith.constant 0 : i32
    %c0_i32_1 = arith.constant 0 : i32
    return %c0_i32, %c0_i32_0 : i32, i32
  }
  func.func @transform_8(%arg0: i32) -> (i32, i32) {
    %c0_i32 = arith.constant 0 : i32
    %c0_i32_0 = arith.constant 0 : i32
    %c0_i32_1 = arith.constant 0 : i32
    return %c0_i32, %c0_i32_0 : i32, i32
  }
  func.func @transform_9(%arg0: i32) -> (i32, i32) {
    %c0_i32 = arith.constant 0 : i32
    %c0_i32_0 = arith.constant 0 : i32
    return %arg0, %c0_i32 : i32, i32
  }
}

</mosaic_0001>

<llo_original>
// kernel: tpu_custom_call.1
$region0: #{tpu_custom_call.1}
  #allocation0 [shape = 'u32[]', space=smem, size = 0x4, offset = 0x4, fixed_abs, tag = 'smem constant byte address 0x4 - core index']
  #allocation1 [shape = 'u32[144,128]{1,0:T(1,128)}', space=vmem, size = 0x12000, scoped, tag = 'internal scratch']
  %s0 = inlined_call_operand.vmem [shape: bf16[32,32], index: 0, kind: input, shape index: {}]
  %s1 = inlined_call_operand.vmem [shape: bf16[32,128], index: 1, kind: input, shape index: {}]
  %s2 = inlined_call_operand.vmem [shape: f32[1,8], index: 2, kind: input, shape index: {}]
  %s3 = inlined_call_operand.vmem [shape: f32[1,8], index: 3, kind: input, shape index: {}]
  %s4 = inlined_call_operand.vmem [shape: f32[1,8], index: 4, kind: input, shape index: {}]
  %s5 = inlined_call_operand.vmem [shape: f32[8,4], index: 5, kind: input, shape index: {}]
  %s6 = inlined_call_operand.vmem [shape: f32[8,4], index: 6, kind: input, shape index: {}]
  %s7 = inlined_call_operand.vmem [shape: f32[8,4], index: 7, kind: input, shape index: {}]
  %s8 = inlined_call_operand.vmem [shape: f32[1,4], index: 8, kind: input, shape index: {}]
  %s9 = inlined_call_operand.hbm [shape: f32[2,4], index: 9, kind: output, shape index: {}]
  %s10 = sld [smem:[#allocation0]]
  $region46: #{tpu_custom_call.1} parent=0
    _
  %s12 = ssub.s32 1, %s10
  %s13 = scalar_select 0, %s12, %s10
  $region1: #{tpu_custom_call.1} parent=0
    #allocation2 [shape = 'u8[1024]{0}', space=vmem, size = 0x400, scoped, tag = 'output window, operand 0, single buffered']
    #allocation3 [shape = 's32[1]{0}', space=sflag, size = 0x4, scoped, tag = 'scoped memory for tpu_custom_call.1']
    %14 = vsyncpa [#allocation3], 0
    // Predicated region
    $region2: #{tpu_custom_call.1} parent=1 // pred_check
      _
    $region3: #{tpu_custom_call.1} parent=1 // pred_check_branch
      %16 = sbr.rel (0) target = $region5
    $region4: #{tpu_custom_call.1} parent=1 // pred_region
      _
    $region5: #{tpu_custom_call.1} parent=1 // pred_fallthru
      _
    // Predicated region
    $region6: #{tpu_custom_call.1} parent=1 // pred_check
      _
    $region7: #{tpu_custom_call.1} parent=1 // pred_check_branch
      %18 = sbr.rel (0) target = $region9
    $region8: #{tpu_custom_call.1} parent=1 // pred_region
      _
    $region9: #{tpu_custom_call.1} parent=1 // pred_fallthru
      _
    // Predicated region
    $region10: #{tpu_custom_call.1} parent=1 // pred_check
      _
    $region11: #{tpu_custom_call.1} parent=1 // pred_check_branch
      %20 = sbr.rel (0) target = $region13
    $region12: #{tpu_custom_call.1} parent=1 // pred_region
      _
    $region13: #{tpu_custom_call.1} parent=1 // pred_fallthru
      _
    // Predicated region
    $region14: #{tpu_custom_call.1} parent=1 // pred_check
      _
    $region15: #{tpu_custom_call.1} parent=1 // pred_check_branch
      %22 = sbr.rel (0) target = $region17
    $region16: #{tpu_custom_call.1} parent=1 // pred_region
      _
    $region17: #{tpu_custom_call.1} parent=1 // pred_fallthru
      _
    // Predicated region
    $region18: #{tpu_custom_call.1} parent=1 // pred_check
      _
    $region19: #{tpu_custom_call.1} parent=1 // pred_check_branch
      %24 = sbr.rel (0) target = $region21
    $region20: #{tpu_custom_call.1} parent=1 // pred_region
      _
    $region21: #{tpu_custom_call.1} parent=1 // pred_fallthru
      _
    // Predicated region
    $region22: #{tpu_custom_call.1} parent=1 // pred_check
      _
    $region23: #{tpu_custom_call.1} parent=1 // pred_check_branch
      %26 = sbr.rel (0) target = $region25
    $region24: #{tpu_custom_call.1} parent=1 // pred_region
      _
    $region25: #{tpu_custom_call.1} parent=1 // pred_fallthru
      _
    // Predicated region
    $region26: #{tpu_custom_call.1} parent=1 // pred_check
      _
    $region27: #{tpu_custom_call.1} parent=1 // pred_check_branch
      %28 = sbr.rel (0) target = $region29
    $region28: #{tpu_custom_call.1} parent=1 // pred_region
      _
    $region29: #{tpu_custom_call.1} parent=1 // pred_fallthru
      _
    // Predicated region
    $region30: #{tpu_custom_call.1} parent=1 // pred_check
      _
    $region31: #{tpu_custom_call.1} parent=1 // pred_check_branch
      %30 = sbr.rel (0) target = $region33
    $region32: #{tpu_custom_call.1} parent=1 // pred_region
      _
    $region33: #{tpu_custom_call.1} parent=1 // pred_fallthru
      _
    // Predicated region
    $region34: #{tpu_custom_call.1} parent=1 // pred_check
      _
    $region35: #{tpu_custom_call.1} parent=1 // pred_check_branch
      %32 = sbr.rel (0) target = $region37
    $region36: #{tpu_custom_call.1} parent=1 // pred_region
      _
    $region37: #{tpu_custom_call.1} parent=1 // pred_fallthru
      _
    %v34 = vld [vmem:[%s0] sm:$0xf]
    %v35 = vld [vmem:[%s0 + $0x4] sm:$0xf]
    %v36 = vld [vmem:[%s0 + $0x8] sm:$0xf]
    %v37 = vld [vmem:[%s0 + $0xc] sm:$0xf]
    %v38 = vld [vmem:[%s1] sm:$0xf]
    %v39 = vld [vmem:[%s1 + $0x4] sm:$0xf]
    %v40 = vld [vmem:[%s1 + $0x8] sm:$0xf]
    %v41 = vld [vmem:[%s1 + $0xc] sm:$0xf]
    %v46 = vunpack.c.l.b16 %v34
    %v47 = vunpack.c.l.b16 %v35
    %v48 = vunpack.c.l.b16 %v36
    %v49 = vunpack.c.l.b16 %v37
    %v50 = vpack.c.b16 %v47, %v46
    %v51 = vpack.c.b16 %v49, %v48
    %v56 = vunpack.c.l.b16 %v38
    %v57 = vunpack.c.l.b16 %v39
    %v58 = vunpack.c.l.b16 %v40
    %v59 = vunpack.c.l.b16 %v41
    %v60 = vpack.c.b16 %v57, %v56
    %v61 = vpack.c.b16 %v59, %v58
    %vm64 = vcmask 261120
    %v66 = vsel %vm64, %v50, 0
    %v69 = vsel %vm64, %v51, 0
    %71 = vmatprep.subr.bf16.mxu0 0
    %72 = vmatpush1.bf16.msra.mxu0 %v60
    %73 = vmatprep.subr.bf16.mxu0 0
    %74 = vmatpush1.bf16.msra.mxu0 %v61
    %75 = vmatprep.subr.bf16.mxu0 0
    %76 = vmatpush1.bf16.msra.mxu0 0
    %77 = vmatprep.subr.bf16.mxu0 0
    %78 = vmatpush1.bf16.msra.mxu0 0
    %79 = vmatprep.subr.bf16.mxu0 0
    %80 = vmatpush1.bf16.msra.mxu0 0
    %81 = vmatprep.subr.bf16.mxu0 0
    %82 = vmatpush1.bf16.msra.mxu0 0
    %83 = vmatprep.subr.bf16.mxu0 0
    %84 = vmatpush1.bf16.msra.mxu0 0
    %85 = vmatprep.subr.bf16.mxu0 0
    %86 = vmatpush1.bf16.msra.mxu0 0
    %87 = vmatprep.subr.bf16.mxu0 0
    %88 = vmatpush1.bf16.msra.mxu0 0
    %89 = vmatprep.subr.bf16.mxu0 0
    %90 = vmatpush1.bf16.msra.mxu0 0
    %91 = vmatprep.subr.bf16.mxu0 0
    %92 = vmatpush1.bf16.msra.mxu0 0
    %93 = vmatprep.subr.bf16.mxu0 0
    %94 = vmatpush1.bf16.msra.mxu0 0
    %95 = vmatprep.subr.bf16.mxu0 0
    %96 = vmatpush1.bf16.msra.mxu0 0
    %97 = vmatprep.subr.bf16.mxu0 0
    %98 = vmatpush1.bf16.msra.mxu0 0
    %99 = vmatprep.subr.bf16.mxu0 0
    %100 = vmatpush1.bf16.msra.mxu0 0
    %101 = vmatprep.subr.bf16.mxu0 0
    %102 = vmatpush1.bf16.msra.mxu0 0
    %103 = vmatprep.mubr.bf16.mxu0 0
    %104 = vmatmul.mubr.bf16.gmra.mrb[0].mxu0 %v66
    %v105 = vpop.f32.mrb[0].mxu0
    %v106 = vadd.f32 0.0, %v105
    %v107 = vpop.f32.mrb[0].mxu0
    %v108 = vpop.f32.mrb[0].mxu0
    %v109 = vadd.f32 0.0, %v108
    %v110 = vpop.f32.mrb[0].mxu0
    %111 = vmatprep.mubr.bf16.mxu0 0
    %112 = vmatmul.mubr.bf16.gmra.mrb[0].mxu0 %v69
    %v113 = vpop.f32.mrb[0].mxu0
    %v114 = vadd.f32 0.0, %v113
    %v115 = vpop.f32.mrb[0].mxu0
    %v116 = vpop.f32.mrb[0].mxu0
    %v117 = vadd.f32 0.0, %v116
    %v118 = vpop.f32.mrb[0].mxu0
    %119 = vdwg.mxu0
    %v120 = vld [vmem:[%s8] sm:$0x1]
    %v122 = vlaneseq
    %v123 = vshrl.u32 %v122, 7
    %v124 = vsub.s32 0, %v123
    %v125 = vrot.slane %v120, %v124
    %v127 = vadd.f32 %v125, 0.0
    %vm132 = vcmask 1046528
    %v133 = vrot.slane %v106, 1
    %v134 = vrot.slane %v109, 1
    %v135 = vsel %vm132, %v133, %v134
    %v136 = vrot.slane %v114, 1
    %v137 = vrot.slane %v117, 1
    %v138 = vsel %vm132, %v136, %v137
    %139 = vrot.lane.b32.xlu0 %v135, 120
    %v140 = vpop.permute.xlu0 %139
    %141 = vrot.lane.b32.xlu0 %v134, 120
    %v142 = vpop.permute.xlu0 %141
    %143 = vrot.lane.b32.xlu0 %v138, 120
    %v144 = vpop.permute.xlu0 %143
    %145 = vrot.lane.b32.xlu0 %v137, 120
    %v146 = vpop.permute.xlu0 %145
    %v151 = vadd.f32 %v106, %v140
    %v152 = vadd.f32 %v109, %v142
    %v153 = vadd.f32 %v114, %v144
    %v154 = vadd.f32 %v117, %v146
    %v155 = vld [vmem:[%s2] sm:$0x1]
    %v157 = vlaneseq
    %v158 = vshrl.u32 %v157, 7
    %v159 = vsub.s32 0, %v158
    %v160 = vrot.slane %v155, %v159
    %v162 = vadd.f32 %v151, %v160
    %v163 = vadd.f32 %v152, %v160
    %v164 = vadd.f32 %v153, %v160
    %v165 = vadd.f32 %v154, %v160
    %v166 = vmax.f32 %v162, 0.0
    %v167 = vmax.f32 %v163, 0.0
    %v168 = vmax.f32 %v164, 0.0
    %v169 = vmax.f32 %v165, 0.0
    %vm170 = vcmask 64512
    %v171 = vsel %vm170, %v166, -inf
    %vm172 = vcmask 63488
    %v173 = vsel %vm172, %v167, -inf
    %v174 = vmax.f32 %v171, %v173
    %v175 = vrot.slane %v174, 4
    %v176 = vmax.f32 %v174, %v175
    %v177 = vrot.slane %v176, 2
    %v178 = vmax.f32 %v176, %v177
    %v179 = vrot.slane %v178, 1
    %v180 = vmax.f32 %v178, %v179
    %v181 = vsel %vm170, %v168, -inf
    %v182 = vsel %vm172, %v169, -inf
    %v183 = vmax.f32 %v181, %v182
    %v184 = vrot.slane %v183, 4
    %v185 = vmax.f32 %v183, %v184
    %v186 = vrot.slane %v185, 2
    %v187 = vmax.f32 %v185, %v186
    %v188 = vrot.slane %v187, 1
    %v189 = vmax.f32 %v187, %v188
    %v190 = vld [vmem:[%s5] sm:$0xff]
    %vm193 = vcmask 1041409
    %v194 = vsel %vm193, %v189, %v180
    %v195 = vsel %vm170, %v194, 0
    %197 = vmatprep.subr.mxu0 0.0
    %198 = vmatpush1.msra.mxu0 %v190
    %199 = vmatprep.subr.mxu0 0.0
    %200 = vmatpush1.msra.mxu0 0.0
    %201 = vmatprep.subr.mxu0 0.0
    %202 = vmatpush1.msra.mxu0 0.0
    %203 = vmatprep.subr.mxu0 0.0
    %204 = vmatpush1.msra.mxu0 0.0
    %205 = vmatprep.subr.mxu0 0.0
    %206 = vmatpush1.msra.mxu0 0.0
    %207 = vmatprep.subr.mxu0 0.0
    %208 = vmatpush1.msra.mxu0 0.0
    %209 = vmatprep.subr.mxu0 0.0
    %210 = vmatpush1.msra.mxu0 0.0
    %211 = vmatprep.subr.mxu0 0.0
    %212 = vmatpush1.msra.mxu0 0.0
    %213 = vmatprep.subr.mxu0 0.0
    %214 = vmatpush1.msra.mxu0 0.0
    %215 = vmatprep.subr.mxu0 0.0
    %216 = vmatpush1.msra.mxu0 0.0
    %217 = vmatprep.subr.mxu0 0.0
    %218 = vmatpush1.msra.mxu0 0.0
    %219 = vmatprep.subr.mxu0 0.0
    %220 = vmatpush1.msra.mxu0 0.0
    %221 = vmatprep.subr.mxu0 0.0
    %222 = vmatpush1.msra.mxu0 0.0
    %223 = vmatprep.subr.mxu0 0.0
    %224 = vmatpush1.msra.mxu0 0.0
    %225 = vmatprep.subr.mxu0 0.0
    %226 = vmatpush1.msra.mxu0 0.0
    %227 = vmatprep.subr.mxu0 0.0
    %228 = vmatpush1.msra.mxu0 0.0
    %229 = vmatprep.subr.mxu0 0.0
    %230 = vmatpush1.msra.mxu0 0.0
    %231 = vmatprep.subr.mxu0 0.0
    %232 = vmatpush1.msra.mxu0 0.0
    %233 = vmatprep.subr.mxu0 0.0
    %234 = vmatpush1.msra.mxu0 0.0
    %235 = vmatprep.subr.mxu0 0.0
    %236 = vmatpush1.msra.mxu0 0.0
    %237 = vmatprep.subr.mxu0 0.0
    %238 = vmatpush1.msra.mxu0 0.0
    %239 = vmatprep.subr.mxu0 0.0
    %240 = vmatpush1.msra.mxu0 0.0
    %241 = vmatprep.subr.mxu0 0.0
    %242 = vmatpush1.msra.mxu0 0.0
    %243 = vmatprep.subr.mxu0 0.0
    %244 = vmatpush1.msra.mxu0 0.0
    %245 = vmatprep.subr.mxu0 0.0
    %246 = vmatpush1.msra.mxu0 0.0
    %247 = vmatprep.subr.mxu0 0.0
    %248 = vmatpush1.msra.mxu0 0.0
    %249 = vmatprep.subr.mxu0 0.0
    %250 = vmatpush1.msra.mxu0 0.0
    %251 = vmatprep.subr.mxu0 0.0
    %252 = vmatpush1.msra.mxu0 0.0
    %253 = vmatprep.subr.mxu0 0.0
    %254 = vmatpush1.msra.mxu0 0.0
    %255 = vmatprep.subr.mxu0 0.0
    %256 = vmatpush1.msra.mxu0 0.0
    %257 = vmatprep.subr.mxu0 0.0
    %258 = vmatpush1.msra.mxu0 0.0
    %259 = vmatprep.subr.mxu0 0.0
    %260 = vmatpush1.msra.mxu0 0.0
    %261 = vmatprep.mubr.f32.mxu0 0.0
    %262 = vmatmul.mubr.f32.gmra.mrb[0].mxu0 %v195
    %v263 = vpop.f32.mrb[0].mxu0
    %v264 = vadd.f32 0.0, %v263
    %v265 = vpop.f32.mrb[0].mxu0
    %266 = vdwg.mxu0
    %v267 = vadd.f32 %v127, %v264
    %vm268 = vcmask 1045504
    %v269 = vrot.slane %v106, 2
    %v270 = vrot.slane %v109, 2
    %v271 = vsel %vm268, %v269, %v270
    %v272 = vrot.slane %v114, 2
    %v273 = vrot.slane %v117, 2
    %v274 = vsel %vm268, %v272, %v273
    %275 = vrot.lane.b32.xlu0 %v271, 112
    %v276 = vpop.permute.xlu0 %275
    %277 = vrot.lane.b32.xlu0 %v270, 112
    %v278 = vpop.permute.xlu0 %277
    %279 = vrot.lane.b32.xlu0 %v274, 112
    %v280 = vpop.permute.xlu0 %279
    %281 = vrot.lane.b32.xlu0 %v273, 112
    %v282 = vpop.permute.xlu0 %281
    %v287 = vadd.f32 %v151, %v276
    %v288 = vadd.f32 %v152, %v278
    %v289 = vadd.f32 %v153, %v280
    %v290 = vadd.f32 %v154, %v282
    %v291 = vld [vmem:[%s3] sm:$0x1]
    %v293 = vlaneseq
    %v294 = vshrl.u32 %v293, 7
    %v295 = vsub.s32 0, %v294
    %v296 = vrot.slane %v291, %v295
    %297 = vrot.lane.b32.xlu0 %v296, 16
    %v298 = vpop.permute.xlu0 %297
    %v300 = vadd.f32 %v287, %v298
    %v301 = vadd.f32 %v288, %v298
    %v302 = vadd.f32 %v289, %v298
    %v303 = vadd.f32 %v290, %v298
    %v304 = vmax.f32 %v300, 0.0
    %v305 = vmax.f32 %v301, 0.0
    %v306 = vmax.f32 %v302, 0.0
    %v307 = vmax.f32 %v303, 0.0
    %vm308 = vcmask 195712
    %v309 = vsel %vm308, %v304, -inf
    %vm310 = vcmask 193664
    %v311 = vsel %vm310, %v305, -inf
    %v312 = vmax.f32 %v309, %v311
    %v313 = vrot.slane %v312, 4
    %v314 = vmax.f32 %v312, %v313
    %v315 = vrot.slane %v314, 2
    %v316 = vmax.f32 %v314, %v315
    %v317 = vrot.slane %v316, 1
    %v318 = vmax.f32 %v316, %v317
    %v319 = vsel %vm308, %v306, -inf
    %v320 = vsel %vm310, %v307, -inf
    %v321 = vmax.f32 %v319, %v320
    %v322 = vrot.slane %v321, 4
    %v323 = vmax.f32 %v321, %v322
    %v324 = vrot.slane %v323, 2
    %v325 = vmax.f32 %v323, %v324
    %v326 = vrot.slane %v325, 1
    %v327 = vmax.f32 %v325, %v326
    %v328 = vld [vmem:[%s6] sm:$0xff]
    %v331 = vsel %vm193, %v327, %v318
    %332 = vrot.lane.b32.xlu0 %v331, 112
    %v333 = vpop.permute.xlu0 %332
    %v334 = vsel %vm170, %v333, 0
    %336 = vmatprep.subr.mxu0 0.0
    %337 = vmatpush1.msra.mxu0 %v328
    %338 = vmatprep.subr.mxu0 0.0
    %339 = vmatpush1.msra.mxu0 0.0
    %340 = vmatprep.subr.mxu0 0.0
    %341 = vmatpush1.msra.mxu0 0.0
    %342 = vmatprep.subr.mxu0 0.0
    %343 = vmatpush1.msra.mxu0 0.0
    %344 = vmatprep.subr.mxu0 0.0
    %345 = vmatpush1.msra.mxu0 0.0
    %346 = vmatprep.subr.mxu0 0.0
    %347 = vmatpush1.msra.mxu0 0.0
    %348 = vmatprep.subr.mxu0 0.0
    %349 = vmatpush1.msra.mxu0 0.0
    %350 = vmatprep.subr.mxu0 0.0
    %351 = vmatpush1.msra.mxu0 0.0
    %352 = vmatprep.subr.mxu0 0.0
    %353 = vmatpush1.msra.mxu0 0.0
    %354 = vmatprep.subr.mxu0 0.0
    %355 = vmatpush1.msra.mxu0 0.0
    %356 = vmatprep.subr.mxu0 0.0
    %357 = vmatpush1.msra.mxu0 0.0
    %358 = vmatprep.subr.mxu0 0.0
    %359 = vmatpush1.msra.mxu0 0.0
    %360 = vmatprep.subr.mxu0 0.0
    %361 = vmatpush1.msra.mxu0 0.0
    %362 = vmatprep.subr.mxu0 0.0
    %363 = vmatpush1.msra.mxu0 0.0
    %364 = vmatprep.subr.mxu0 0.0
    %365 = vmatpush1.msra.mxu0 0.0
    %366 = vmatprep.subr.mxu0 0.0
    %367 = vmatpush1.msra.mxu0 0.0
    %368 = vmatprep.subr.mxu0 0.0
    %369 = vmatpush1.msra.mxu0 0.0
    %370 = vmatprep.subr.mxu0 0.0
    %371 = vmatpush1.msra.mxu0 0.0
    %372 = vmatprep.subr.mxu0 0.0
    %373 = vmatpush1.msra.mxu0 0.0
    %374 = vmatprep.subr.mxu0 0.0
    %375 = vmatpush1.msra.mxu0 0.0
    %376 = vmatprep.subr.mxu0 0.0
    %377 = vmatpush1.msra.mxu0 0.0
    %378 = vmatprep.subr.mxu0 0.0
    %379 = vmatpush1.msra.mxu0 0.0
    %380 = vmatprep.subr.mxu0 0.0
    %381 = vmatpush1.msra.mxu0 0.0
    %382 = vmatprep.subr.mxu0 0.0
    %383 = vmatpush1.msra.mxu0 0.0
    %384 = vmatprep.subr.mxu0 0.0
    %385 = vmatpush1.msra.mxu0 0.0
    %386 = vmatprep.subr.mxu0 0.0
    %387 = vmatpush1.msra.mxu0 0.0
    %388 = vmatprep.subr.mxu0 0.0
    %389 = vmatpush1.msra.mxu0 0.0
    %390 = vmatprep.subr.mxu0 0.0
    %391 = vmatpush1.msra.mxu0 0.0
    %392 = vmatprep.subr.mxu0 0.0
    %393 = vmatpush1.msra.mxu0 0.0
    %394 = vmatprep.subr.mxu0 0.0
    %395 = vmatpush1.msra.mxu0 0.0
    %396 = vmatprep.subr.mxu0 0.0
    %397 = vmatpush1.msra.mxu0 0.0
    %398 = vmatprep.subr.mxu0 0.0
    %399 = vmatpush1.msra.mxu0 0.0
    %400 = vmatprep.mubr.f32.mxu0 0.0
    %401 = vmatmul.mubr.f32.gmra.mrb[0].mxu0 %v334
    %v402 = vpop.f32.mrb[0].mxu0
    %v403 = vadd.f32 0.0, %v402
    %v404 = vpop.f32.mrb[0].mxu0
    %405 = vdwg.mxu0
    %v406 = vadd.f32 %v267, %v403
    %vm407 = vcmask 1044480
    %v408 = vrot.slane %v106, 3
    %v409 = vrot.slane %v109, 3
    %v410 = vsel %vm407, %v408, %v409
    %v411 = vrot.slane %v114, 3
    %v412 = vrot.slane %v117, 3
    %v413 = vsel %vm407, %v411, %v412
    %414 = vrot.lane.b32.xlu0 %v410, 104
    %v415 = vpop.permute.xlu0 %414
    %416 = vrot.lane.b32.xlu0 %v409, 104
    %v417 = vpop.permute.xlu0 %416
    %418 = vrot.lane.b32.xlu0 %v413, 104
    %v419 = vpop.permute.xlu0 %418
    %420 = vrot.lane.b32.xlu0 %v412, 104
    %v421 = vpop.permute.xlu0 %420
    %v426 = vadd.f32 %v287, %v415
    %v427 = vadd.f32 %v288, %v417
    %v428 = vadd.f32 %v289, %v419
    %v429 = vadd.f32 %v290, %v421
    %v430 = vld [vmem:[%s4] sm:$0x1]
    %v432 = vlaneseq
    %v433 = vshrl.u32 %v432, 7
    %v434 = vsub.s32 0, %v433
    %v435 = vrot.slane %v430, %v434
    %436 = vrot.lane.b32.xlu0 %v435, 40
    %v437 = vpop.permute.xlu0 %436
    %v439 = vadd.f32 %v426, %v437
    %v440 = vadd.f32 %v427, %v437
    %v441 = vadd.f32 %v428, %v437
    %v442 = vadd.f32 %v429, %v437
    %v443 = vmax.f32 %v439, 0.0
    %v444 = vmax.f32 %v440, 0.0
    %v445 = vmax.f32 %v441, 0.0
    %v446 = vmax.f32 %v442, 0.0
    %vm447 = vcmask 392512
    %v448 = vsel %vm447, %v443, -inf
    %vm449 = vcmask 389440
    %v450 = vsel %vm449, %v444, -inf
    %v451 = vmax.f32 %v448, %v450
    %v452 = vrot.slane %v451, 4
    %v453 = vmax.f32 %v451, %v452
    %v454 = vrot.slane %v453, 2
    %v455 = vmax.f32 %v453, %v454
    %v456 = vrot.slane %v455, 1
    %v457 = vmax.f32 %v455, %v456
    %v458 = vsel %vm447, %v445, -inf
    %v459 = vsel %vm449, %v446, -inf
    %v460 = vmax.f32 %v458, %v459
    %v461 = vrot.slane %v460, 4
    %v462 = vmax.f32 %v460, %v461
    %v463 = vrot.slane %v462, 2
    %v464 = vmax.f32 %v462, %v463
    %v465 = vrot.slane %v464, 1
    %v466 = vmax.f32 %v464, %v465
    %v467 = vld [vmem:[%s7] sm:$0xff]
    %v470 = vsel %vm193, %v466, %v457
    %471 = vrot.lane.b32.xlu0 %v470, 88
    %v472 = vpop.permute.xlu0 %471
    %v473 = vsel %vm170, %v472, 0
    %475 = vmatprep.subr.mxu0 0.0
    %476 = vmatpush1.msra.mxu0 %v467
    %477 = vmatprep.subr.mxu0 0.0
    %478 = vmatpush1.msra.mxu0 0.0
    %479 = vmatprep.subr.mxu0 0.0
    %480 = vmatpush1.msra.mxu0 0.0
    %481 = vmatprep.subr.mxu0 0.0
    %482 = vmatpush1.msra.mxu0 0.0
    %483 = vmatprep.subr.mxu0 0.0
    %484 = vmatpush1.msra.mxu0 0.0
    %485 = vmatprep.subr.mxu0 0.0
    %486 = vmatpush1.msra.mxu0 0.0
    %487 = vmatprep.subr.mxu0 0.0
    %488 = vmatpush1.msra.mxu0 0.0
    %489 = vmatprep.subr.mxu0 0.0
    %490 = vmatpush1.msra.mxu0 0.0
    %491 = vmatprep.subr.mxu0 0.0
    %492 = vmatpush1.msra.mxu0 0.0
    %493 = vmatprep.subr.mxu0 0.0
    %494 = vmatpush1.msra.mxu0 0.0
    %495 = vmatprep.subr.mxu0 0.0
    %496 = vmatpush1.msra.mxu0 0.0
    %497 = vmatprep.subr.mxu0 0.0
    %498 = vmatpush1.msra.mxu0 0.0
    %499 = vmatprep.subr.mxu0 0.0
    %500 = vmatpush1.msra.mxu0 0.0
    %501 = vmatprep.subr.mxu0 0.0
    %502 = vmatpush1.msra.mxu0 0.0
    %503 = vmatprep.subr.mxu0 0.0
    %504 = vmatpush1.msra.mxu0 0.0
    %505 = vmatprep.subr.mxu0 0.0
    %506 = vmatpush1.msra.mxu0 0.0
    %507 = vmatprep.subr.mxu0 0.0
    %508 = vmatpush1.msra.mxu0 0.0
    %509 = vmatprep.subr.mxu0 0.0
    %510 = vmatpush1.msra.mxu0 0.0
    %511 = vmatprep.subr.mxu0 0.0
    %512 = vmatpush1.msra.mxu0 0.0
    %513 = vmatprep.subr.mxu0 0.0
    %514 = vmatpush1.msra.mxu0 0.0
    %515 = vmatprep.subr.mxu0 0.0
    %516 = vmatpush1.msra.mxu0 0.0
    %517 = vmatprep.subr.mxu0 0.0
    %518 = vmatpush1.msra.mxu0 0.0
    %519 = vmatprep.subr.mxu0 0.0
    %520 = vmatpush1.msra.mxu0 0.0
    %521 = vmatprep.subr.mxu0 0.0
    %522 = vmatpush1.msra.mxu0 0.0
    %523 = vmatprep.subr.mxu0 0.0
    %524 = vmatpush1.msra.mxu0 0.0
    %525 = vmatprep.subr.mxu0 0.0
    %526 = vmatpush1.msra.mxu0 0.0
    %527 = vmatprep.subr.mxu0 0.0
    %528 = vmatpush1.msra.mxu0 0.0
    %529 = vmatprep.subr.mxu0 0.0
    %530 = vmatpush1.msra.mxu0 0.0
    %531 = vmatprep.subr.mxu0 0.0
    %532 = vmatpush1.msra.mxu0 0.0
    %533 = vmatprep.subr.mxu0 0.0
    %534 = vmatpush1.msra.mxu0 0.0
    %535 = vmatprep.subr.mxu0 0.0
    %536 = vmatpush1.msra.mxu0 0.0
    %537 = vmatprep.subr.mxu0 0.0
    %538 = vmatpush1.msra.mxu0 0.0
    %539 = vmatprep.mubr.f32.mxu0 0.0
    %540 = vmatmul.mubr.f32.gmra.mrb[0].mxu0 %v473
    %v541 = vpop.f32.mrb[0].mxu0
    %v542 = vadd.f32 0.0, %v541
    %v543 = vpop.f32.mrb[0].mxu0
    %544 = vdwg.mxu0
    %v545 = vadd.f32 %v406, %v542
    %vm546 = vcmask 25600
    %547 = vst.msk [vmem:[#allocation2] sm:$0x3] %vm546, %v545
    // Predicated region
    $region38: #{tpu_custom_call.1} parent=1 // pred_check
      _
    $region39: #{tpu_custom_call.1} parent=1 // pred_check_branch
      %549 = sbr.rel (0) target = $region41
    $region40: #{tpu_custom_call.1} parent=1 // pred_region
      %s551 = ssub.s32 32, 32
      %552 = vsyncadd [#allocation3], %s551
      %s554 = sshll.u32 [#allocation2], 4
      %s555 = int_to_ptr.vmem [resolvable:$true] %s554
      %557 = dma.vmem_to_hbm [thread:$0]  %s555, 32, %s9, [#allocation3]
    $region41: #{tpu_custom_call.1} parent=1 // pred_fallthru
      _
    // Predicated region
    $region42: #{tpu_custom_call.1} parent=1 // pred_check
      _
    $region43: #{tpu_custom_call.1} parent=1 // pred_check_branch
      %559 = sbr.rel (0) target = $region45
    $region44: #{tpu_custom_call.1} parent=1 // pred_region
      %560 = dma.done [#allocation3], 32
    $region45: #{tpu_custom_call.1} parent=1 // pred_fallthru
      _
    %561 = vsyncpa [#allocation3], 1

</llo_original>
